<compile_context>
chip_gen: v7x
topology: tpu7x:2x2x1
jax: 0.10.0
libtpu: 0.0.40
codegen_flags: <defaults>
</compile_context>

<pallas_src>
import jax
import jax.numpy as jnp
from jax.experimental import pallas as pl
from jax.experimental.pallas import tpu as pltpu


def gcn_gru_kernel(a_ref, x_ref, wg_ref, wgate_ref, b_ref, wfc_t_ref, o_ref):
    """Fused GCNConv -> single-step GRU (h0 = 0) -> Linear(hidden, 1).

    a_ref      : (N, N)      dense D^-1/2 (A + I) D^-1/2
    x_ref      : (N, t_in)   node features (time window)
    wg_ref     : (t_in, H)   GCN weight
    wgate_ref  : (H, 3H)     [W_ir | W_iz | W_in]
    b_ref      : (6, H)      rows: b_gcn, b_r(=b_ir+b_hr), b_z(=b_iz+b_hz),
                             b_in, b_hn, [b_fc, 0, ...]
    wfc_t_ref  : (1, H)      fc weight, transposed
    o_ref      : (1, N)      lane-dense output (nodes along lanes)
    """
    f32 = jnp.float32
    hid = wg_ref.shape[1]

    # --- GCN: g = (A_norm @ X) @ Wg + b_gcn  (reassociated: contract over t_in)
    ax = jnp.dot(a_ref[...], x_ref[...], preferred_element_type=f32)      # (N, t_in)
    g = jnp.dot(ax, wg_ref[...], preferred_element_type=f32) + b_ref[0:1, :]

    # --- GRU, single time step, h_prev = 0 (recurrent matmuls are exactly 0) --
    # One fused matmul for all three gates, then static lane slices.
    gates = jnp.dot(g, wgate_ref[...], preferred_element_type=f32)        # (N, 3H)
    r = jax.nn.sigmoid(gates[:, 0:hid]         + b_ref[1:2, :])
    z = jax.nn.sigmoid(gates[:, hid:2 * hid]   + b_ref[2:3, :])
    n = jnp.tanh(gates[:, 2 * hid:3 * hid]     + b_ref[3:4, :] + r * b_ref[4:5, :])
    h = (1.0 - z) * n                                                     # (N, H)

    # --- fc: contract over H, produce (1, N) directly (lane-dense store) ------
    o = jax.lax.dot_general(
        wfc_t_ref[...], h,
        dimension_numbers=(((1,), (1,)), ((), ())),
        preferred_element_type=f32)                                       # (1, N)
    o_ref[...] = o + b_ref[5:6, 0:1]


def build_gcn_adjacency(edge_idx, num_nodes):
    """Dense GCN-normalized adjacency (PyG gcn_norm semantics).

    Duplicate edges are summed, self-loops of weight 1 are added on top of the
    existing edges, then D^-1/2 (A + I) D^-1/2. Build this ONCE per graph and
    reuse it across forward calls (the graph is static in train_forecast.py).
    """
    src = edge_idx[0]
    dst = edge_idx[1]
    a = jnp.zeros((num_nodes, num_nodes), jnp.float32)
    a = a.at[dst, src].add(1.0)                          # sum duplicate edges
    a = a + jnp.eye(num_nodes, dtype=jnp.float32)        # add self-loops
    deg = a.sum(axis=1)
    dinv = jnp.where(deg > 0.0, jax.lax.rsqrt(deg), 0.0)
    return dinv[:, None] * a * dinv[None, :]


def pack_params(raw):
    """One-time parameter packing (done at param-prep time, not per call)."""
    hid = raw["w_ir"].shape[0]
    w_gates = jnp.concatenate([raw["w_ir"], raw["w_iz"], raw["w_in"]], axis=1)  # (H, 3H)
    b_fc_row = jnp.zeros((1, hid), jnp.float32).at[0, 0].set(raw["b_fc"][0, 0])
    biases = jnp.concatenate([
        raw["b_gcn"],                       # row 0: GCN bias
        raw["b_ir"] + raw["b_hr"],          # row 1: folded reset-gate bias
        raw["b_iz"] + raw["b_hz"],          # row 2: folded update-gate bias
        raw["b_in"],                        # row 3: candidate input bias
        raw["b_hn"],                        # row 4: candidate hidden bias (scaled by r)
        b_fc_row,                           # row 5: fc bias in element [5, 0]
    ], axis=0)                                                                   # (6, H)
    return {
        "w_gcn": raw["w_gcn"],              # (t_in, H)
        "w_gates": w_gates,                 # (H, 3H)
        "biases": biases,                   # (6, H)
        "w_fc_t": raw["w_fc"].T,            # (1, H)
    }


def gcn_gru_forward(a_norm, x_seq, packed):
    """a_norm: [N, N] f32 (cached), x_seq: [N, t_in]. Returns [N] f32."""
    n_nodes = x_seq.shape[0]
    args = (
        a_norm,
        x_seq.astype(jnp.float32),
        packed["w_gcn"],
        packed["w_gates"],
        packed["biases"],
        packed["w_fc_t"],
    )
    vmem_spec = pl.BlockSpec(memory_space=pltpu.MemorySpace.VMEM)
    out = pl.pallas_call(
        gcn_gru_kernel,
        out_shape=jax.ShapeDtypeStruct((1, n_nodes), jnp.float32),
        in_specs=[vmem_spec] * len(args),
        out_specs=vmem_spec,
    )(*args)
    return out[0]                                         # (N,)  == .squeeze()


def init_params(key, t_in, hidden):
    ks = jax.random.split(key, 8)
    s = 0.1
    f32 = jnp.float32
    raw = {
        # GCNConv: weight (t_in, hidden) [math layout], bias (1, hidden)
        "w_gcn": s * jax.random.normal(ks[0], (t_in, hidden), f32),
        "b_gcn": s * jax.random.normal(ks[1], (1, hidden), f32),
        # GRU input-to-hidden weights (hidden, hidden) per gate, biases (1, hidden)
        "w_ir": s * jax.random.normal(ks[2], (hidden, hidden), f32),
        "w_iz": s * jax.random.normal(ks[3], (hidden, hidden), f32),
        "w_in": s * jax.random.normal(ks[4], (hidden, hidden), f32),
        "b_ir": s * jax.random.normal(ks[5], (1, hidden), f32),
        "b_iz": s * jax.random.normal(ks[5], (1, hidden), f32) * 0.5,
        "b_in": s * jax.random.normal(ks[5], (1, hidden), f32) * 0.25,
        "b_hr": s * jax.random.normal(ks[6], (1, hidden), f32),
        "b_hz": s * jax.random.normal(ks[6], (1, hidden), f32) * 0.5,
        "b_hn": s * jax.random.normal(ks[6], (1, hidden), f32) * 0.25,
        # NOTE: GRU hidden-to-hidden weights (W_hr/W_hz/W_hn) are omitted on
        # purpose: seq_len == 1 and h0 == 0, so their contribution is exactly 0.
        # Linear(hidden, 1)
        "w_fc": s * jax.random.normal(ks[7], (hidden, 1), f32),
        "b_fc": s * jnp.ones((1, 1), f32),
    }
    return pack_params(raw)


if __name__ == "__main__":
    N, T_IN, HIDDEN, E = 16, 8, 32, 48

    key = jax.random.PRNGKey(0)
    k_x, k_e1, k_e2, k_p = jax.random.split(key, 4)

    x_seq = jax.random.normal(k_x, (N, T_IN), jnp.float32)
    edge_idx = jnp.stack([
        jax.random.randint(k_e1, (E,), 0, N, dtype=jnp.int32),
        jax.random.randint(k_e2, (E,), 0, N, dtype=jnp.int32),
    ], axis=0)

    params = init_params(k_p, T_IN, HIDDEN)

    # Static graph: build the normalized dense adjacency ONCE and reuse it.
    a_norm = build_gcn_adjacency(edge_idx, N)

    fwd = jax.jit(gcn_gru_forward)
    out = fwd(a_norm, x_seq, params)
    out = jax.block_until_ready(out)
    assert out.shape == (N,), out.shape
    assert jnp.all(jnp.isfinite(out))
    print("KERNEL_OK")
</pallas_src>

<mosaic_0001>
module attributes {stable_mosaic.version = 11 : i64} {
  func.func @gcn_gru_kernel(%arg0: memref<16x16xf32, #tpu.memory_space<vmem>>, %arg1: memref<16x8xf32, #tpu.memory_space<vmem>>, %arg2: memref<8x32xf32, #tpu.memory_space<vmem>>, %arg3: memref<32x96xf32, #tpu.memory_space<vmem>>, %arg4: memref<6x32xf32, #tpu.memory_space<vmem>>, %arg5: memref<1x32xf32, #tpu.memory_space<vmem>>, %arg6: memref<1x16xf32, #tpu.memory_space<vmem>>) attributes {dimension_semantics = [], scalar_prefetch = 0 : i64, scratch_operands = 0 : i64, tpu.core_type = #tpu.core_type<tc>} {
    %c0 = arith.constant 0 : index
    %c0_0 = arith.constant 0 : index
    %0 = vector.load %arg0[%c0, %c0_0] : memref<16x16xf32, #tpu.memory_space<vmem>>, vector<16x16xf32>
    %c0_1 = arith.constant 0 : index
    %c0_2 = arith.constant 0 : index
    %1 = vector.load %arg1[%c0_1, %c0_2] : memref<16x8xf32, #tpu.memory_space<vmem>>, vector<16x8xf32>
    %cst = arith.constant dense<0.000000e+00> : vector<16x8xf32>
    %2 = tpu.matmul %0, %1, %cst {dimension_numbers = #tpu.dot_dimension_numbers<[1], [0], [0], [1], [0, 0, 1, 1], [], []>} : vector<16x16xf32>, vector<16x8xf32>, vector<16x8xf32> -> vector<16x8xf32>
    %c0_3 = arith.constant 0 : index
    %c0_4 = arith.constant 0 : index
    %3 = vector.load %arg2[%c0_3, %c0_4] : memref<8x32xf32, #tpu.memory_space<vmem>>, vector<8x32xf32>
    %cst_5 = arith.constant dense<0.000000e+00> : vector<16x32xf32>
    %4 = tpu.matmul %2, %3, %cst_5 {dimension_numbers = #tpu.dot_dimension_numbers<[1], [0], [0], [1], [0, 0, 1, 1], [], []>} : vector<16x8xf32>, vector<8x32xf32>, vector<16x32xf32> -> vector<16x32xf32>
    %c0_6 = arith.constant 0 : index
    %c0_7 = arith.constant 0 : index
    %5 = vector.load %arg4[%c0_6, %c0_7] : memref<6x32xf32, #tpu.memory_space<vmem>>, vector<1x32xf32>
    %6 = vector.broadcast %5 : vector<1x32xf32> to vector<16x32xf32>
    %7 = arith.addf %4, %6 : vector<16x32xf32>
    %c0_8 = arith.constant 0 : index
    %c0_9 = arith.constant 0 : index
    %8 = vector.load %arg3[%c0_8, %c0_9] : memref<32x96xf32, #tpu.memory_space<vmem>>, vector<32x96xf32>
    %cst_10 = arith.constant dense<0.000000e+00> : vector<16x96xf32>
    %9 = tpu.matmul %7, %8, %cst_10 {dimension_numbers = #tpu.dot_dimension_numbers<[1], [0], [0], [1], [0, 0, 1, 1], [], []>} : vector<16x32xf32>, vector<32x96xf32>, vector<16x96xf32> -> vector<16x96xf32>
    %10 = vector.extract_strided_slice %9 {offsets = [0, 0], sizes = [16, 32], strides = [1, 1]} : vector<16x96xf32> to vector<16x32xf32>
    %c1 = arith.constant 1 : index
    %c0_11 = arith.constant 0 : index
    %11 = vector.load %arg4[%c1, %c0_11] : memref<6x32xf32, #tpu.memory_space<vmem>>, vector<1x32xf32>
    %12 = vector.broadcast %11 : vector<1x32xf32> to vector<16x32xf32>
    %13 = arith.addf %10, %12 : vector<16x32xf32>
    %14 = arith.negf %13 : vector<16x32xf32>
    %15 = math.exp %14 : vector<16x32xf32>
    %cst_12 = arith.constant 1.000000e+00 : f32
    %16 = vector.broadcast %cst_12 : f32 to vector<16x32xf32>
    %17 = arith.addf %16, %15 : vector<16x32xf32>
    %18 = arith.divf %16, %17 : vector<16x32xf32>
    %19 = vector.extract_strided_slice %9 {offsets = [0, 32], sizes = [16, 32], strides = [1, 1]} : vector<16x96xf32> to vector<16x32xf32>
    %c2 = arith.constant 2 : index
    %c0_13 = arith.constant 0 : index
    %20 = vector.load %arg4[%c2, %c0_13] : memref<6x32xf32, #tpu.memory_space<vmem>>, vector<1x32xf32>
    %21 = vector.broadcast %20 : vector<1x32xf32> to vector<16x32xf32>
    %22 = arith.addf %19, %21 : vector<16x32xf32>
    %23 = arith.negf %22 : vector<16x32xf32>
    %24 = math.exp %23 : vector<16x32xf32>
    %cst_14 = arith.constant 1.000000e+00 : f32
    %25 = vector.broadcast %cst_14 : f32 to vector<16x32xf32>
    %26 = arith.addf %25, %24 : vector<16x32xf32>
    %27 = arith.divf %25, %26 : vector<16x32xf32>
    %28 = vector.extract_strided_slice %9 {offsets = [0, 64], sizes = [16, 32], strides = [1, 1]} : vector<16x96xf32> to vector<16x32xf32>
    %c3 = arith.constant 3 : index
    %c0_15 = arith.constant 0 : index
    %29 = vector.load %arg4[%c3, %c0_15] : memref<6x32xf32, #tpu.memory_space<vmem>>, vector<1x32xf32>
    %30 = vector.broadcast %29 : vector<1x32xf32> to vector<16x32xf32>
    %31 = arith.addf %28, %30 : vector<16x32xf32>
    %c4 = arith.constant 4 : index
    %c0_16 = arith.constant 0 : index
    %32 = vector.load %arg4[%c4, %c0_16] : memref<6x32xf32, #tpu.memory_space<vmem>>, vector<1x32xf32>
    %33 = vector.broadcast %32 : vector<1x32xf32> to vector<16x32xf32>
    %34 = arith.mulf %18, %33 : vector<16x32xf32>
    %35 = arith.addf %31, %34 : vector<16x32xf32>
    %36 = math.tanh %35 : vector<16x32xf32>
    %cst_17 = arith.constant 1.000000e+00 : f32
    %37 = vector.broadcast %cst_17 : f32 to vector<16x32xf32>
    %38 = arith.subf %37, %27 : vector<16x32xf32>
    %39 = arith.mulf %38, %36 : vector<16x32xf32>
    %c0_18 = arith.constant 0 : index
    %c0_19 = arith.constant 0 : index
    %40 = vector.load %arg5[%c0_18, %c0_19] : memref<1x32xf32, #tpu.memory_space<vmem>>, vector<1x32xf32>
    %cst_20 = arith.constant dense<0.000000e+00> : vector<1x16xf32>
    %41 = tpu.matmul %40, %39, %cst_20 {dimension_numbers = #tpu.dot_dimension_numbers<[1], [1], [0], [0], [0, 0, 1, 0], [], []>} : vector<1x32xf32>, vector<16x32xf32>, vector<1x16xf32> -> vector<1x16xf32>
    %c5 = arith.constant 5 : index
    %c0_21 = arith.constant 0 : index
    %42 = vector.load %arg4[%c5, %c0_21] : memref<6x32xf32, #tpu.memory_space<vmem>>, vector<1x1xf32>
    %43 = vector.broadcast %42 : vector<1x1xf32> to vector<1x16xf32>
    %44 = arith.addf %41, %43 : vector<1x16xf32>
    %c0_22 = arith.constant 0 : index
    %c0_23 = arith.constant 0 : index
    %45 = vector.load %arg6[%c0_22, %c0_23] : memref<1x16xf32, #tpu.memory_space<vmem>>, vector<1x16xf32>
    tpu.vector_store %arg6[%c0_22, %c0_23], %44 {strides = array<i32>} : memref<1x16xf32, #tpu.memory_space<vmem>>, vector<1x16xf32>,
    return
  }
}

</mosaic_0001>

<llo_original>
// kernel: gcn_gru_forward.1
$region0: #{gcn_gru_forward.1}
  #allocation0 [shape = 'u32[]', space=smem, size = 0x4, offset = 0x4, fixed_abs, tag = 'smem constant byte address 0x4 - core index']
  #allocation1 [shape = 'u32[144,128]{1,0:T(1,128)}', space=vmem, size = 0x12000, scoped, tag = 'internal scratch']
  %s0 = inlined_call_operand.hbm [shape: f32[16,16], index: 0, kind: input, shape index: {}]
  %s1 = inlined_call_operand.vmem [shape: f32[16,8], index: 1, kind: input, shape index: {}]
  %s2 = inlined_call_operand.vmem [shape: f32[8,32], index: 2, kind: input, shape index: {}]
  %s3 = inlined_call_operand.vmem [shape: f32[32,96], index: 3, kind: input, shape index: {}]
  %s4 = inlined_call_operand.hbm [shape: f32[6,32], index: 4, kind: input, shape index: {}]
  %s5 = inlined_call_operand.vmem [shape: f32[1,32], index: 5, kind: input, shape index: {}]
  %s6 = inlined_call_operand.hbm [shape: f32[1,16], index: 6, kind: output, shape index: {}]
  %s7 = sld [smem:[#allocation0]]
  $region42: #{gcn_gru_forward.1} parent=0
    _
  %s9 = ssub.s32 1, %s7
  %s10 = scalar_select 0, %s9, %s7
  $region1: #{gcn_gru_forward.1} parent=0
    #allocation2 [shape = 'u8[8192]{0}', space=vmem, size = 0x2000, scoped, tag = 'input window, operand 0, single buffered']
    #allocation3 [shape = 's32[1]{0}', space=sflag, size = 0x4, scoped, tag = 'scoped memory for gcn_gru_forward.1']
    #allocation4 [shape = 's32[1]{0}', space=sflag, size = 0x4, scoped, tag = 'scoped memory for gcn_gru_forward.1']
    #allocation5 [shape = 'u8[4096]{0}', space=vmem, size = 0x1000, scoped, tag = 'input window, operand 4, single buffered']
    #allocation6 [shape = 's32[1]{0}', space=sflag, size = 0x4, scoped, tag = 'scoped memory for gcn_gru_forward.1']
    #allocation7 [shape = 'u8[512]{0}', space=vmem, size = 0x400, scoped, tag = 'output window, operand 0, single buffered']
    %11 = vsyncpa [#allocation3], 0
    %12 = vsyncpa [#allocation6], 0
    %13 = vsyncpa [#allocation4], 0
    // Predicated region
    $region2: #{gcn_gru_forward.1} parent=1 // pred_check
      _
    $region3: #{gcn_gru_forward.1} parent=1 // pred_check_branch
      %15 = sbr.rel (0) target = $region5
    $region4: #{gcn_gru_forward.1} parent=1 // pred_region
      %s17 = ssub.s32 256, 256
      %18 = vsyncadd [#allocation3], %s17
      %s19 = sshll.u32 [#allocation2], 4
      %s20 = int_to_ptr.vmem [resolvable:$true] %s19
      %25 = dma.hbm_to_vmem [thread:$0]  %s0, 256, %s20, [#allocation3], 128, 128, 8
    $region5: #{gcn_gru_forward.1} parent=1 // pred_fallthru
      _
    // Predicated region
    $region6: #{gcn_gru_forward.1} parent=1 // pred_check
      _
    $region7: #{gcn_gru_forward.1} parent=1 // pred_check_branch
      %27 = sbr.rel (0) target = $region9
    $region8: #{gcn_gru_forward.1} parent=1 // pred_region
      _
    $region9: #{gcn_gru_forward.1} parent=1 // pred_fallthru
      _
    // Predicated region
    $region10: #{gcn_gru_forward.1} parent=1 // pred_check
      _
    $region11: #{gcn_gru_forward.1} parent=1 // pred_check_branch
      %29 = sbr.rel (0) target = $region13
    $region12: #{gcn_gru_forward.1} parent=1 // pred_region
      _
    $region13: #{gcn_gru_forward.1} parent=1 // pred_fallthru
      _
    // Predicated region
    $region14: #{gcn_gru_forward.1} parent=1 // pred_check
      _
    $region15: #{gcn_gru_forward.1} parent=1 // pred_check_branch
      %31 = sbr.rel (0) target = $region17
    $region16: #{gcn_gru_forward.1} parent=1 // pred_region
      _
    $region17: #{gcn_gru_forward.1} parent=1 // pred_fallthru
      _
    // Predicated region
    $region18: #{gcn_gru_forward.1} parent=1 // pred_check
      _
    $region19: #{gcn_gru_forward.1} parent=1 // pred_check_branch
      %33 = sbr.rel (0) target = $region21
    $region20: #{gcn_gru_forward.1} parent=1 // pred_region
      %s35 = ssub.s32 128, 128
      %36 = vsyncadd [#allocation6], %s35
      %s38 = sshll.u32 [#allocation5], 4
      %s39 = int_to_ptr.vmem [resolvable:$true] %s38
      %41 = dma.hbm_to_vmem [thread:$0]  %s4, 128, %s39, [#allocation6]
    $region21: #{gcn_gru_forward.1} parent=1 // pred_fallthru
      _
    // Predicated region
    $region22: #{gcn_gru_forward.1} parent=1 // pred_check
      _
    $region23: #{gcn_gru_forward.1} parent=1 // pred_check_branch
      %43 = sbr.rel (0) target = $region25
    $region24: #{gcn_gru_forward.1} parent=1 // pred_region
      _
    $region25: #{gcn_gru_forward.1} parent=1 // pred_fallthru
      _
    // Predicated region
    $region26: #{gcn_gru_forward.1} parent=1 // pred_check
      _
    $region27: #{gcn_gru_forward.1} parent=1 // pred_check_branch
      %45 = sbr.rel (0) target = $region29
    $region28: #{gcn_gru_forward.1} parent=1 // pred_region
      %46 = dma.done [#allocation3], 256
    $region29: #{gcn_gru_forward.1} parent=1 // pred_fallthru
      _
    // Predicated region
    $region30: #{gcn_gru_forward.1} parent=1 // pred_check
      _
    $region31: #{gcn_gru_forward.1} parent=1 // pred_check_branch
      %48 = sbr.rel (0) target = $region33
    $region32: #{gcn_gru_forward.1} parent=1 // pred_region
      %49 = dma.done [#allocation6], 128
    $region33: #{gcn_gru_forward.1} parent=1 // pred_fallthru
      _
    %v50 = vld [vmem:[#allocation2] sm:$0xff]
    %v51 = vld [vmem:[#allocation2 + $0x8] sm:$0xff]
    %v52 = vld [vmem:[%s1] sm:$0xff]
    %v53 = vld [vmem:[%s1 + $0x8] sm:$0xff]
    %vm54 = vcmask 130048
    %v56 = vsel %vm54, %v50, 0
    %v59 = vsel %vm54, %v51, 0
    %61 = vmatprep.subr.mxu0 0.0
    %62 = vmatpush1.msra.mxu0 %v52
    %63 = vmatprep.subr.mxu0 0.0
    %64 = vmatpush1.msra.mxu0 %v53
    %65 = vmatprep.subr.mxu0 0.0
    %66 = vmatpush1.msra.mxu0 0.0
    %67 = vmatprep.subr.mxu0 0.0
    %68 = vmatpush1.msra.mxu0 0.0
    %69 = vmatprep.subr.mxu0 0.0
    %70 = vmatpush1.msra.mxu0 0.0
    %71 = vmatprep.subr.mxu0 0.0
    %72 = vmatpush1.msra.mxu0 0.0
    %73 = vmatprep.subr.mxu0 0.0
    %74 = vmatpush1.msra.mxu0 0.0
    %75 = vmatprep.subr.mxu0 0.0
    %76 = vmatpush1.msra.mxu0 0.0
    %77 = vmatprep.subr.mxu0 0.0
    %78 = vmatpush1.msra.mxu0 0.0
    %79 = vmatprep.subr.mxu0 0.0
    %80 = vmatpush1.msra.mxu0 0.0
    %81 = vmatprep.subr.mxu0 0.0
    %82 = vmatpush1.msra.mxu0 0.0
    %83 = vmatprep.subr.mxu0 0.0
    %84 = vmatpush1.msra.mxu0 0.0
    %85 = vmatprep.subr.mxu0 0.0
    %86 = vmatpush1.msra.mxu0 0.0
    %87 = vmatprep.subr.mxu0 0.0
    %88 = vmatpush1.msra.mxu0 0.0
    %89 = vmatprep.subr.mxu0 0.0
    %90 = vmatpush1.msra.mxu0 0.0
    %91 = vmatprep.subr.mxu0 0.0
    %92 = vmatpush1.msra.mxu0 0.0
    %93 = vmatprep.subr.mxu0 0.0
    %94 = vmatpush1.msra.mxu0 0.0
    %95 = vmatprep.subr.mxu0 0.0
    %96 = vmatpush1.msra.mxu0 0.0
    %97 = vmatprep.subr.mxu0 0.0
    %98 = vmatpush1.msra.mxu0 0.0
    %99 = vmatprep.subr.mxu0 0.0
    %100 = vmatpush1.msra.mxu0 0.0
    %101 = vmatprep.subr.mxu0 0.0
    %102 = vmatpush1.msra.mxu0 0.0
    %103 = vmatprep.subr.mxu0 0.0
    %104 = vmatpush1.msra.mxu0 0.0
    %105 = vmatprep.subr.mxu0 0.0
    %106 = vmatpush1.msra.mxu0 0.0
    %107 = vmatprep.subr.mxu0 0.0
    %108 = vmatpush1.msra.mxu0 0.0
    %109 = vmatprep.subr.mxu0 0.0
    %110 = vmatpush1.msra.mxu0 0.0
    %111 = vmatprep.subr.mxu0 0.0
    %112 = vmatpush1.msra.mxu0 0.0
    %113 = vmatprep.subr.mxu0 0.0
    %114 = vmatpush1.msra.mxu0 0.0
    %115 = vmatprep.subr.mxu0 0.0
    %116 = vmatpush1.msra.mxu0 0.0
    %117 = vmatprep.subr.mxu0 0.0
    %118 = vmatpush1.msra.mxu0 0.0
    %119 = vmatprep.subr.mxu0 0.0
    %120 = vmatpush1.msra.mxu0 0.0
    %121 = vmatprep.subr.mxu0 0.0
    %122 = vmatpush1.msra.mxu0 0.0
    %123 = vmatprep.subr.mxu0 0.0
    %124 = vmatpush1.msra.mxu0 0.0
    %125 = vmatprep.mubr.f32.mxu0 0.0
    %126 = vmatmul.mubr.f32.gmra.mrb[0].mxu0 %v56
    %v127 = vpop.f32.mrb[0].mxu0
    %v128 = vadd.f32 0.0, %v127
    %v129 = vpop.f32.mrb[0].mxu0
    %130 = vmatprep.mubr.f32.mxu0 0.0
    %131 = vmatmul.mubr.f32.gmra.mrb[0].mxu0 %v59
    %v132 = vpop.f32.mrb[0].mxu0
    %v133 = vadd.f32 0.0, %v132
    %v134 = vpop.f32.mrb[0].mxu0
    %135 = vdwg.mxu0
    %v136 = vld [vmem:[%s2] sm:$0xff]
    %v137 = vld [vmem:[#allocation5] sm:$0x1]
    %v138 = vlaneseq
    %v139 = vshrl.u32 %v138, 7
    %v140 = vsub.s32 0, %v139
    %v141 = vrot.slane %v137, %v140
    %vm142 = vcmask 64512
    %v144 = vsel %vm142, %v128, 0
    %v147 = vsel %vm142, %v133, 0
    %149 = vmatprep.subr.mxu0 0.0
    %150 = vmatpush1.msra.mxu0 %v136
    %151 = vmatprep.subr.mxu0 0.0
    %152 = vmatpush1.msra.mxu0 0.0
    %153 = vmatprep.subr.mxu0 0.0
    %154 = vmatpush1.msra.mxu0 0.0
    %155 = vmatprep.subr.mxu0 0.0
    %156 = vmatpush1.msra.mxu0 0.0
    %157 = vmatprep.subr.mxu0 0.0
    %158 = vmatpush1.msra.mxu0 0.0
    %159 = vmatprep.subr.mxu0 0.0
    %160 = vmatpush1.msra.mxu0 0.0
    %161 = vmatprep.subr.mxu0 0.0
    %162 = vmatpush1.msra.mxu0 0.0
    %163 = vmatprep.subr.mxu0 0.0
    %164 = vmatpush1.msra.mxu0 0.0
    %165 = vmatprep.subr.mxu0 0.0
    %166 = vmatpush1.msra.mxu0 0.0
    %167 = vmatprep.subr.mxu0 0.0
    %168 = vmatpush1.msra.mxu0 0.0
    %169 = vmatprep.subr.mxu0 0.0
    %170 = vmatpush1.msra.mxu0 0.0
    %171 = vmatprep.subr.mxu0 0.0
    %172 = vmatpush1.msra.mxu0 0.0
    %173 = vmatprep.subr.mxu0 0.0
    %174 = vmatpush1.msra.mxu0 0.0
    %175 = vmatprep.subr.mxu0 0.0
    %176 = vmatpush1.msra.mxu0 0.0
    %177 = vmatprep.subr.mxu0 0.0
    %178 = vmatpush1.msra.mxu0 0.0
    %179 = vmatprep.subr.mxu0 0.0
    %180 = vmatpush1.msra.mxu0 0.0
    %181 = vmatprep.subr.mxu0 0.0
    %182 = vmatpush1.msra.mxu0 0.0
    %183 = vmatprep.subr.mxu0 0.0
    %184 = vmatpush1.msra.mxu0 0.0
    %185 = vmatprep.subr.mxu0 0.0
    %186 = vmatpush1.msra.mxu0 0.0
    %187 = vmatprep.subr.mxu0 0.0
    %188 = vmatpush1.msra.mxu0 0.0
    %189 = vmatprep.subr.mxu0 0.0
    %190 = vmatpush1.msra.mxu0 0.0
    %191 = vmatprep.subr.mxu0 0.0
    %192 = vmatpush1.msra.mxu0 0.0
    %193 = vmatprep.subr.mxu0 0.0
    %194 = vmatpush1.msra.mxu0 0.0
    %195 = vmatprep.subr.mxu0 0.0
    %196 = vmatpush1.msra.mxu0 0.0
    %197 = vmatprep.subr.mxu0 0.0
    %198 = vmatpush1.msra.mxu0 0.0
    %199 = vmatprep.subr.mxu0 0.0
    %200 = vmatpush1.msra.mxu0 0.0
    %201 = vmatprep.subr.mxu0 0.0
    %202 = vmatpush1.msra.mxu0 0.0
    %203 = vmatprep.subr.mxu0 0.0
    %204 = vmatpush1.msra.mxu0 0.0
    %205 = vmatprep.subr.mxu0 0.0
    %206 = vmatpush1.msra.mxu0 0.0
    %207 = vmatprep.subr.mxu0 0.0
    %208 = vmatpush1.msra.mxu0 0.0
    %209 = vmatprep.subr.mxu0 0.0
    %210 = vmatpush1.msra.mxu0 0.0
    %211 = vmatprep.subr.mxu0 0.0
    %212 = vmatpush1.msra.mxu0 0.0
    %213 = vmatprep.mubr.f32.mxu0 0.0
    %214 = vmatmul.mubr.f32.gmra.mrb[0].mxu0 %v144
    %v215 = vpop.f32.mrb[0].mxu0
    %v216 = vadd.f32 %v141, %v215
    %v217 = vpop.f32.mrb[0].mxu0
    %218 = vmatprep.mubr.f32.mxu0 0.0
    %219 = vmatmul.mubr.f32.gmra.mrb[0].mxu0 %v147
    %v220 = vpop.f32.mrb[0].mxu0
    %v221 = vadd.f32 %v141, %v220
    %v222 = vpop.f32.mrb[0].mxu0
    %223 = vdwg.mxu0
    %v224 = vld [vmem:[%s3] sm:$0xff]
    %v225 = vld [vmem:[%s3 + $0x8] sm:$0xff]
    %v226 = vld [vmem:[%s3 + $0x10] sm:$0xff]
    %v227 = vld [vmem:[%s3 + $0x18] sm:$0xff]
    %vm228 = vcmask 261120
    %v230 = vsel %vm228, %v216, 0
    %v233 = vsel %vm228, %v221, 0
    %235 = vmatprep.subr.mxu0 0.0
    %236 = vmatpush1.msra.mxu0 %v224
    %237 = vmatprep.subr.mxu0 0.0
    %238 = vmatpush1.msra.mxu0 %v225
    %239 = vmatprep.subr.mxu0 0.0
    %240 = vmatpush1.msra.mxu0 %v226
    %241 = vmatprep.subr.mxu0 0.0
    %242 = vmatpush1.msra.mxu0 %v227
    %243 = vmatprep.subr.mxu0 0.0
    %244 = vmatpush1.msra.mxu0 0.0
    %245 = vmatprep.subr.mxu0 0.0
    %246 = vmatpush1.msra.mxu0 0.0
    %247 = vmatprep.subr.mxu0 0.0
    %248 = vmatpush1.msra.mxu0 0.0
    %249 = vmatprep.subr.mxu0 0.0
    %250 = vmatpush1.msra.mxu0 0.0
    %251 = vmatprep.subr.mxu0 0.0
    %252 = vmatpush1.msra.mxu0 0.0
    %253 = vmatprep.subr.mxu0 0.0
    %254 = vmatpush1.msra.mxu0 0.0
    %255 = vmatprep.subr.mxu0 0.0
    %256 = vmatpush1.msra.mxu0 0.0
    %257 = vmatprep.subr.mxu0 0.0
    %258 = vmatpush1.msra.mxu0 0.0
    %259 = vmatprep.subr.mxu0 0.0
    %260 = vmatpush1.msra.mxu0 0.0
    %261 = vmatprep.subr.mxu0 0.0
    %262 = vmatpush1.msra.mxu0 0.0
    %263 = vmatprep.subr.mxu0 0.0
    %264 = vmatpush1.msra.mxu0 0.0
    %265 = vmatprep.subr.mxu0 0.0
    %266 = vmatpush1.msra.mxu0 0.0
    %267 = vmatprep.subr.mxu0 0.0
    %268 = vmatpush1.msra.mxu0 0.0
    %269 = vmatprep.subr.mxu0 0.0
    %270 = vmatpush1.msra.mxu0 0.0
    %271 = vmatprep.subr.mxu0 0.0
    %272 = vmatpush1.msra.mxu0 0.0
    %273 = vmatprep.subr.mxu0 0.0
    %274 = vmatpush1.msra.mxu0 0.0
    %275 = vmatprep.subr.mxu0 0.0
    %276 = vmatpush1.msra.mxu0 0.0
    %277 = vmatprep.subr.mxu0 0.0
    %278 = vmatpush1.msra.mxu0 0.0
    %279 = vmatprep.subr.mxu0 0.0
    %280 = vmatpush1.msra.mxu0 0.0
    %281 = vmatprep.subr.mxu0 0.0
    %282 = vmatpush1.msra.mxu0 0.0
    %283 = vmatprep.subr.mxu0 0.0
    %284 = vmatpush1.msra.mxu0 0.0
    %285 = vmatprep.subr.mxu0 0.0
    %286 = vmatpush1.msra.mxu0 0.0
    %287 = vmatprep.subr.mxu0 0.0
    %288 = vmatpush1.msra.mxu0 0.0
    %289 = vmatprep.subr.mxu0 0.0
    %290 = vmatpush1.msra.mxu0 0.0
    %291 = vmatprep.subr.mxu0 0.0
    %292 = vmatpush1.msra.mxu0 0.0
    %293 = vmatprep.subr.mxu0 0.0
    %294 = vmatpush1.msra.mxu0 0.0
    %295 = vmatprep.subr.mxu0 0.0
    %296 = vmatpush1.msra.mxu0 0.0
    %297 = vmatprep.subr.mxu0 0.0
    %298 = vmatpush1.msra.mxu0 0.0
    %299 = vmatprep.mubr.f32.mxu0 0.0
    %300 = vmatmul.mubr.f32.gmra.mrb[0].mxu0 %v230
    %v301 = vpop.f32.mrb[0].mxu0
    %v302 = vadd.f32 0.0, %v301
    %v303 = vpop.f32.mrb[0].mxu0
    %304 = vmatprep.mubr.f32.mxu0 0.0
    %305 = vmatmul.mubr.f32.gmra.mrb[0].mxu0 %v233
    %v306 = vpop.f32.mrb[0].mxu0
    %v307 = vadd.f32 0.0, %v306
    %v308 = vpop.f32.mrb[0].mxu0
    %309 = vdwg.mxu0
    %v310 = vld [vmem:[#allocation5 + $0x1] sm:$0x1]
    %v311 = vlaneseq
    %v312 = vshrl.u32 %v311, 7
    %v313 = vsub.s32 0, %v312
    %v314 = vrot.slane %v310, %v313
    %v315 = vadd.f32 %v302, %v314
    %v316 = vadd.f32 %v307, %v314
    %v317 = vxor.u32 %v315, 2147483648
    %v318 = vxor.u32 %v316, 2147483648
    %v319 = vmul.f32 %v317, 1.442695
    %v320 = vpow.pop %v319
    %v321 = vmul.f32 %v318, 1.442695
    %v322 = vpow.pop %v321
    %v323 = vadd.f32 %v320, 1.0
    %v324 = vadd.f32 %v322, 1.0
    %v325 = vrcp.pop %v323
    %v326 = vmul.f32 1.0, %v325
    %v327 = vrcp.pop %v324
    %v328 = vmul.f32 1.0, %v327
    %v329 = vld [vmem:[#allocation5 + $0x2] sm:$0x1]
    %v330 = vlaneseq
    %v331 = vshrl.u32 %v330, 7
    %v332 = vsub.s32 0, %v331
    %v333 = vrot.slane %v329, %v332
    %335 = vrot.lane.b32.xlu0 %v333, 32
    %v336 = vpop.permute.xlu0 %335
    %v338 = vadd.f32 %v302, %v336
    %v339 = vadd.f32 %v307, %v336
    %v340 = vxor.u32 %v338, 2147483648
    %v341 = vxor.u32 %v339, 2147483648
    %v342 = vmul.f32 %v340, 1.442695
    %v343 = vpow.pop %v342
    %v344 = vmul.f32 %v341, 1.442695
    %v345 = vpow.pop %v344
    %v346 = vadd.f32 %v343, 1.0
    %v347 = vadd.f32 %v345, 1.0
    %v348 = vrcp.pop %v346
    %v349 = vmul.f32 1.0, %v348
    %v350 = vrcp.pop %v347
    %v351 = vmul.f32 1.0, %v350
    %v352 = vld [vmem:[#allocation5 + $0x3] sm:$0x1]
    %v353 = vlaneseq
    %v354 = vshrl.u32 %v353, 7
    %v355 = vsub.s32 0, %v354
    %v356 = vrot.slane %v352, %v355
    %358 = vrot.lane.b32.xlu0 %v356, 64
    %v359 = vpop.permute.xlu0 %358
    %v361 = vadd.f32 %v302, %v359
    %v362 = vadd.f32 %v307, %v359
    %v363 = vld [vmem:[#allocation5 + $0x4] sm:$0x1]
    %v364 = vlaneseq
    %v365 = vshrl.u32 %v364, 7
    %v366 = vsub.s32 0, %v365
    %v367 = vrot.slane %v363, %v366
    %v368 = vmul.f32 %v326, %v367
    %v369 = vmul.f32 %v328, %v367
    %372 = vrot.lane.b32.xlu0 %v368, 64
    %v373 = vpop.permute.xlu0 %372
    %374 = vrot.lane.b32.xlu0 %v369, 64
    %v375 = vpop.permute.xlu0 %374
    %v378 = vadd.f32 %v361, %v373
    %v379 = vadd.f32 %v362, %v375
    %v380 = vtanh.pop %v378
    %v381 = vtanh.pop %v379
    %v382 = vsub.f32 1.0, %v349
    %v383 = vsub.f32 1.0, %v351
    %386 = vrot.lane.b32.xlu0 %v380, 96
    %v387 = vpop.permute.xlu0 %386
    %388 = vrot.lane.b32.xlu0 %v381, 96
    %v389 = vpop.permute.xlu0 %388
    %v392 = vmul.f32 %v382, %v387
    %v393 = vmul.f32 %v383, %v389
    %v394 = vld [vmem:[%s5] sm:$0x1]
    %v395 = vld [vmem:[#allocation5 + $0x5] sm:$0x1]
    %397 = vset.pattern.permute.xlu0 0
    %398 = vperm.xlu0 %397, %v395
    %v399 = vpop.permute.xlu0 %398
    %403 = vrot.lane.b32.xlu0 %v392, 96
    %v404 = vpop.permute.xlu0 %403
    %405 = vrot.lane.b32.xlu0 %v393, 96
    %v406 = vpop.permute.xlu0 %405
    %v408 = vsel %vm228, %v394, 0
    %v410 = vsel %vm228, %v404, 0
    %v412 = vsel %vm228, %v406, 0
    %414 = vmatprep.subr.mxu0 0.0
    %415 = vmatpush1.xpose.msra.mxu0 %v410
    %416 = vmatprep.subr.mxu0 0.0
    %417 = vmatpush1.xpose.msra.mxu0 %v412
    %418 = vmatprep.subr.mxu0 0.0
    %419 = vmatpush1.xpose.msra.mxu0 0.0
    %420 = vmatprep.subr.mxu0 0.0
    %421 = vmatpush1.xpose.msra.mxu0 0.0
    %422 = vmatprep.subr.mxu0 0.0
    %423 = vmatpush1.xpose.msra.mxu0 0.0
    %424 = vmatprep.subr.mxu0 0.0
    %425 = vmatpush1.xpose.msra.mxu0 0.0
    %426 = vmatprep.subr.mxu0 0.0
    %427 = vmatpush1.xpose.msra.mxu0 0.0
    %428 = vmatprep.subr.mxu0 0.0
    %429 = vmatpush1.xpose.msra.mxu0 0.0
    %430 = vmatprep.subr.mxu0 0.0
    %431 = vmatpush1.xpose.msra.mxu0 0.0
    %432 = vmatprep.subr.mxu0 0.0
    %433 = vmatpush1.xpose.msra.mxu0 0.0
    %434 = vmatprep.subr.mxu0 0.0
    %435 = vmatpush1.xpose.msra.mxu0 0.0
    %436 = vmatprep.subr.mxu0 0.0
    %437 = vmatpush1.xpose.msra.mxu0 0.0
    %438 = vmatprep.subr.mxu0 0.0
    %439 = vmatpush1.xpose.msra.mxu0 0.0
    %440 = vmatprep.subr.mxu0 0.0
    %441 = vmatpush1.xpose.msra.mxu0 0.0
    %442 = vmatprep.subr.mxu0 0.0
    %443 = vmatpush1.xpose.msra.mxu0 0.0
    %444 = vmatprep.subr.mxu0 0.0
    %445 = vmatpush1.xpose.msra.mxu0 0.0
    %446 = vmatprep.subr.mxu0 0.0
    %447 = vmatpush1.xpose.msra.mxu0 0.0
    %448 = vmatprep.subr.mxu0 0.0
    %449 = vmatpush1.xpose.msra.mxu0 0.0
    %450 = vmatprep.subr.mxu0 0.0
    %451 = vmatpush1.xpose.msra.mxu0 0.0
    %452 = vmatprep.subr.mxu0 0.0
    %453 = vmatpush1.xpose.msra.mxu0 0.0
    %454 = vmatprep.subr.mxu0 0.0
    %455 = vmatpush1.xpose.msra.mxu0 0.0
    %456 = vmatprep.subr.mxu0 0.0
    %457 = vmatpush1.xpose.msra.mxu0 0.0
    %458 = vmatprep.subr.mxu0 0.0
    %459 = vmatpush1.xpose.msra.mxu0 0.0
    %460 = vmatprep.subr.mxu0 0.0
    %461 = vmatpush1.xpose.msra.mxu0 0.0
    %462 = vmatprep.subr.mxu0 0.0
    %463 = vmatpush1.xpose.msra.mxu0 0.0
    %464 = vmatprep.subr.mxu0 0.0
    %465 = vmatpush1.xpose.msra.mxu0 0.0
    %466 = vmatprep.subr.mxu0 0.0
    %467 = vmatpush1.xpose.msra.mxu0 0.0
    %468 = vmatprep.subr.mxu0 0.0
    %469 = vmatpush1.xpose.msra.mxu0 0.0
    %470 = vmatprep.subr.mxu0 0.0
    %471 = vmatpush1.xpose.msra.mxu0 0.0
    %472 = vmatprep.subr.mxu0 0.0
    %473 = vmatpush1.xpose.msra.mxu0 0.0
    %474 = vmatprep.subr.mxu0 0.0
    %475 = vmatpush1.xpose.msra.mxu0 0.0
    %476 = vmatprep.subr.mxu0 0.0
    %477 = vmatpush1.xpose.msra.mxu0 0.0
    %478 = vmatprep.mubr.f32.mxu0 0.0
    %479 = vmatmul.mubr.f32.gmra.mrb[0].mxu0 %v408
    %v480 = vpop.f32.mrb[0].mxu0
    %v481 = vadd.f32 %v399, %v480
    %v482 = vpop.f32.mrb[0].mxu0
    %483 = vdwg.mxu0
    %vm484 = vcmask 122880
    %485 = vst.msk [vmem:[#allocation7] sm:$0x1] %vm484, %v481
    // Predicated region
    $region34: #{gcn_gru_forward.1} parent=1 // pred_check
      _
    $region35: #{gcn_gru_forward.1} parent=1 // pred_check_branch
      %487 = sbr.rel (0) target = $region37
    $region36: #{gcn_gru_forward.1} parent=1 // pred_region
      %s489 = ssub.s32 16, 16
      %490 = vsyncadd [#allocation4], %s489
      %s492 = sshll.u32 [#allocation7], 4
      %s493 = int_to_ptr.vmem [resolvable:$true] %s492
      %495 = dma.vmem_to_hbm [thread:$0]  %s493, 16, %s6, [#allocation4]
    $region37: #{gcn_gru_forward.1} parent=1 // pred_fallthru
      _
    // Predicated region
    $region38: #{gcn_gru_forward.1} parent=1 // pred_check
      _
    $region39: #{gcn_gru_forward.1} parent=1 // pred_check_branch
      %497 = sbr.rel (0) target = $region41
    $region40: #{gcn_gru_forward.1} parent=1 // pred_region
      %498 = dma.done [#allocation4], 16
    $region41: #{gcn_gru_forward.1} parent=1 // pred_fallthru
      _
    %499 = vsyncpa [#allocation3], 1
    %500 = vsyncpa [#allocation6], 1
    %501 = vsyncpa [#allocation4], 1

</llo_original>
